<compile_context>
chip_gen: v5e
topology: v5e:2x2
jax: 0.10.0
libtpu: 0.0.40
codegen_flags: <defaults>
</compile_context>

<pallas_src>
import jax
import jax.numpy as jnp
from jax.experimental import pallas as pl
from jax.experimental.pallas import tpu as pltpu

_LANE = 128
_COL_CANDIDATES = (1024, 512, 256, 128)
_MAX_TILE_BYTES = 4 * 1024 * 1024     # hard per-array tile cap (v7x-safe)
_MID_TILE_BYTES = 2 * 1024 * 1024     # preferred tile size for mid-size slabs
_VMEM_LIMIT_BYTES = 32 * 1024 * 1024  # 2x(in+out) double-buffered 4 MiB tiles fit
_SMALL_N = 1 << 16                    # below this, a fused XLA add is cheaper


def _cdiv(a: int, b: int) -> int:
    return -(-a // b)


def _round_up(a: int, b: int) -> int:
    return _cdiv(a, b) * b


def _sublane(dtype) -> int:
    """Dtype-aware sublane alignment for block_rows."""
    itemsize = jnp.dtype(dtype).itemsize
    if itemsize >= 4:
        return 8
    if itemsize == 2:
        return 16
    return 32


def _choose_cols(n: int):
    """Largest lane-dense column count that divides n exactly (or None)."""
    for c in _COL_CANDIDATES:
        if n % c == 0:
            return c
    return None


def _choose_block_rows(rows: int, cols: int, itemsize: int, sub: int) -> int:
    """Pick block_rows (multiple of `sub`, tile <= 4 MiB, pipeline-friendly)."""
    bytes_per_row = cols * itemsize

    def rows_for_bytes(nbytes: int) -> int:
        return max(sub, (nbytes // bytes_per_row) // sub * sub)

    cap_rows = rows_for_bytes(_MAX_TILE_BYTES)   # 4 MiB hard cap
    mid_rows = rows_for_bytes(_MID_TILE_BYTES)   # ~2 MiB preferred
    rows_aligned = _round_up(rows, sub)

    if rows_aligned <= mid_rows:
        # Whole slab fits in (at most) one ~2 MiB tile: split into two
        # sub-aligned steps so both v7x TensorCores get a tile each.
        if rows_aligned >= 2 * sub:
            return _round_up(_cdiv(rows_aligned, 2), sub)
        return rows_aligned

    if _cdiv(rows, cap_rows) >= 16:
        # Very large slab: plenty of steps even with 4 MiB tiles.
        block_rows = cap_rows
    else:
        # Mid-size slab: ~1-2 MiB tiles, aim for >= 8 steps (>= 4 per TC).
        block_rows = min(mid_rows, max(sub, (rows // 8) // sub * sub))

    # Best-effort even step count so the v7x megacore split is balanced.
    steps = _cdiv(rows, block_rows)
    if steps > 1 and steps % 2 == 1:
        cand = max(sub, _round_up(_cdiv(rows, steps + 1), sub))
        if _cdiv(rows, cand) % 2 == 0 and cand * bytes_per_row <= _MAX_TILE_BYTES:
            block_rows = cand
    return block_rows


def _bias_add_kernel(bias_ref, x_ref, o_ref):
    # bias_ref: SMEM (1,) f32 scalar; x_ref / o_ref: VMEM tiles.
    # Compute in f32 (no-op casts for f32 inputs, cheap VPU casts for bf16)
    # so the SMEM scalar stays 32-bit; the splat-add is free filler under the
    # HBM-bound roofline.
    o_ref[...] = (x_ref[...].astype(jnp.float32) + bias_ref[0]).astype(o_ref.dtype)


def _pallas_bias_add_2d(x2d: jax.Array, bias1d: jax.Array,
                        block_rows: int, donate: bool) -> jax.Array:
    rows, cols = x2d.shape
    grid = (pl.cdiv(rows, block_rows),)  # ragged last block is masked by Pallas
    aliases = {1: 0} if donate else {}
    return pl.pallas_call(
        _bias_add_kernel,
        out_shape=jax.ShapeDtypeStruct((rows, cols), x2d.dtype),
        grid_spec=pltpu.PrefetchScalarGridSpec(
            num_scalar_prefetch=0,
            grid=grid,
            in_specs=[
                pl.BlockSpec(memory_space=pltpu.SMEM),               # scalar bias
                pl.BlockSpec((block_rows, cols), lambda i: (i, 0)),  # x tile
            ],
            out_specs=pl.BlockSpec((block_rows, cols), lambda i: (i, 0)),
        ),
        input_output_aliases=aliases,
        compiler_params=pltpu.CompilerParams(
            dimension_semantics=("parallel",),
            vmem_limit_bytes=_VMEM_LIMIT_BYTES,
        ),
    )(bias1d, x2d)


def bias_forward(x: jax.Array, bias: jax.Array, donate_x: bool = False) -> jax.Array:
    """Adds a scalar bias to x elementwise (semantics of Bias.forward).

    Output dtype == x dtype (the f32 bias is cast into x's dtype on the way
    out); this deviates from PyTorch promotion for bf16/f16 x, intentionally.
    Set donate_x=True only if the caller donates x's buffer.
    """
    orig_shape = x.shape
    dtype = x.dtype
    n = x.size
    if n == 0:
        return x

    bias1d = jnp.asarray(bias, dtype=jnp.float32).reshape(1)
    bias_x = bias1d[0].astype(dtype)  # scalar in x's dtype for XLA fast paths

    # Tiny inputs: fixed pallas_call + per-step overhead dominates; XLA fuses
    # the add for free.
    if n < _SMALL_N:
        return x + bias_x

    itemsize = jnp.dtype(dtype).itemsize
    sub = _sublane(dtype)
    cols = _choose_cols(n)

    if cols is not None:
        # Zero-copy path: flat bitcast-reshape to a lane-dense (rows, cols)
        # slab; no padding, no output slicing.
        rows = n // cols
        block_rows = _choose_block_rows(rows, cols, itemsize, sub)
        out2d = _pallas_bias_add_2d(x.reshape(rows, cols), bias1d,
                                    block_rows, donate_x)
        return out2d.reshape(orig_shape)

    # Ragged size (n % 128 != 0): kernel over the 128-aligned bulk, tiny fused
    # XLA add over the < 128-element tail.
    main = (n // _LANE) * _LANE
    x_flat = x.reshape(-1)
    cols = _choose_cols(main)  # 128 always divides `main`
    rows = main // cols
    block_rows = _choose_block_rows(rows, cols, itemsize, sub)
    main_out = _pallas_bias_add_2d(x_flat[:main].reshape(rows, cols), bias1d,
                                   block_rows, donate_x)
    tail_out = x_flat[main:] + bias_x
    return jnp.concatenate([main_out.reshape(-1), tail_out]).reshape(orig_shape)


if __name__ == "__main__":
    key = jax.random.PRNGKey(0)

    # Bias(initial_value=0) would give bias = 0.0; use a nonzero value so the
    # add is observable in the checks.
    initial_value = 0.5
    bias_param = jnp.array([initial_value], dtype=jnp.float32)

    # Small NCHW activation consistent with the module's usage (fast path).
    x_small = jax.random.normal(key, (2, 4, 16, 16), dtype=jnp.float32)
    y_small = bias_forward(x_small, bias_param)
    jax.block_until_ready(y_small)
    assert y_small.shape == x_small.shape and y_small.dtype == x_small.dtype
    assert jnp.allclose(y_small, x_small + initial_value, atol=1e-6), "mismatch (small)"

    # Large enough to exercise the Pallas kernel (n divisible by 1024).
    x_big = jax.random.normal(key, (2, 4, 128, 128), dtype=jnp.float32)
    y_big = bias_forward(x_big, bias_param)
    jax.block_until_ready(y_big)
    assert jnp.allclose(y_big, x_big + initial_value, atol=1e-6), "mismatch (kernel)"

    # Robustness coverage of the different tiling paths.
    checks = [
        ((513, 128), jnp.float32),    # cols=128, ragged final row-block
        ((257, 513), jnp.float32),    # n % 128 != 0 -> bulk kernel + JAX tail
        ((200, 1024), jnp.bfloat16),  # 16-bit dtype -> 16-row sublane alignment
        ((1200, 1024), jnp.float32),  # mid-size slab -> multi-step, even grid
    ]
    for shape, dt in checks:
        xi = jax.random.normal(jax.random.PRNGKey(1), shape,
                               dtype=jnp.float32).astype(dt)
        yi = bias_forward(xi, bias_param)
        jax.block_until_ready(yi)
        ref = (xi.astype(jnp.float32) + initial_value).astype(dt)
        tol = 1e-6 if dt == jnp.float32 else 2e-2
        assert yi.shape == xi.shape and yi.dtype == xi.dtype, f"meta mismatch {shape}"
        assert jnp.allclose(yi.astype(jnp.float32), ref.astype(jnp.float32),
                            atol=tol), f"mismatch {shape} {dt}"

    print("KERNEL_OK")
</pallas_src>

<mosaic_0001>
module attributes {stable_mosaic.version = 11 : i64} {
  func.func @_bias_add_kernel(%arg0: i32, %arg1: memref<1xf32, #tpu.memory_space<smem>>, %arg2: memref<64x1024xf32, #tpu.memory_space<vmem>>, %arg3: memref<64x1024xf32, #tpu.memory_space<vmem>>) attributes {dimension_semantics = [#tpu.dimension_semantics<parallel>], iteration_bounds = array<i64: 2>, scalar_prefetch = 0 : i64, scratch_operands = 0 : i64, tpu.core_type = #tpu.core_type<tc>, window_params = [{transform_indices = @transform_0, window_bounds = array<i64: 1>}, {transform_indices = @transform_1, window_bounds = array<i64: 64, 1024>}, {transform_indices = @transform_2, window_bounds = array<i64: 64, 1024>}]} {
    %c0 = arith.constant 0 : index
    %c0_0 = arith.constant 0 : index
    %0 = vector.load %arg2[%c0, %c0_0] : memref<64x1024xf32, #tpu.memory_space<vmem>>, vector<64x1024xf32>
    %c0_1 = arith.constant 0 : index
    %1 = memref.load %arg1[%c0_1] : memref<1xf32, #tpu.memory_space<smem>>
    %2 = vector.broadcast %1 : f32 to vector<64x1024xf32>
    %3 = arith.addf %0, %2 : vector<64x1024xf32>
    %c0_2 = arith.constant 0 : index
    %c0_3 = arith.constant 0 : index
    %4 = vector.load %arg3[%c0_2, %c0_3] : memref<64x1024xf32, #tpu.memory_space<vmem>>, vector<64x1024xf32>
    tpu.vector_store %arg3[%c0_2, %c0_3], %3 {strides = array<i32>} : memref<64x1024xf32, #tpu.memory_space<vmem>>, vector<64x1024xf32>,
    return
  }
  func.func @transform_0(%arg0: i32) -> i32 {
    %c0_i32 = arith.constant 0 : i32
    %c0_i32_0 = arith.constant 0 : i32
    return %c0_i32 : i32
  }
  func.func @transform_1(%arg0: i32) -> (i32, i32) {
    %c0_i32 = arith.constant 0 : i32
    %c0_i32_0 = arith.constant 0 : i32
    return %arg0, %c0_i32 : i32, i32
  }
  func.func @transform_2(%arg0: i32) -> (i32, i32) {
    %c0_i32 = arith.constant 0 : i32
    %c0_i32_0 = arith.constant 0 : i32
    return %arg0, %c0_i32 : i32, i32
  }
}

</mosaic_0001>

<llo_original>
// kernel: tpu_custom_call.1
$region0: #{tpu_custom_call.1}
  #allocation0 [shape = 'u32[]', space=smem, size = 0x4, offset = 0x4, fixed_abs, tag = 'smem constant byte address 0x4 - core index']
  #allocation1 [shape = 'u32[72,128]{1,0:T(1,128)}', space=vmem, size = 0x9000, scoped, tag = 'internal scratch']
  #allocation2 [shape = 'f32[1]{0:T(128)S(6)}', space=smem, size = 0x200, scoped, tag = 'scoped memory for tpu_custom_call.1']
  %s0 = inlined_call_operand.<no memory space> [shape: f32[1], index: 0, kind: input, shape index: {}]
  %s1 = inlined_call_operand.hbm [shape: f32[128,1024], index: 1, kind: input, shape index: {}]
  %s2 = inlined_call_operand.hbm [shape: f32[128,1024], index: 2, kind: output, shape index: {}]
  %s3 = sld [smem:[#allocation0]]
  $region45: #{tpu_custom_call.1} parent=0
    _
  %s5 = ssub.s32 1, %s3
  %s6 = scalar_select 0, %s5, %s3
  %7 = sst [smem:[#allocation2]] %s0
  $region1: #{tpu_custom_call.1} parent=0
    #allocation3 [shape = 'u8[524288]{0}', space=vmem, size = 0x80000, scoped, tag = 'input window, operand 1']
    #allocation4 [shape = 's32[2]{0}', space=sflag, size = 0x8, scoped, tag = 'scoped memory for tpu_custom_call.1']
    #allocation5 [shape = 's32[2]{0}', space=sflag, size = 0x8, scoped, tag = 'scoped memory for tpu_custom_call.1']
    #allocation6 [shape = 'u8[524288]{0}', space=vmem, size = 0x80000, scoped, tag = 'output window, operand 0']
    %8 = vsyncpa [#allocation4], 0
    %s9 = scalar_lea.sflag [#allocation4], 1
    %10 = vsyncpa %s9, 0
    %11 = vsyncpa [#allocation5], 0
    %s12 = scalar_lea.sflag [#allocation5], 1
    %13 = vsyncpa %s12, 0
    loop: start=0, step=1, limit=4
    $region2: #{tpu_custom_call.1} parent=1 // loop_pre_header
      _
    $region3: #{tpu_custom_call.1} parent=1 // loop_header
      %s15 = sphi 0, %s19
      %p16 = scmp.ge.s32.totalorder %s15, 4
      %s23 = sphi 0, %s23
      %s25 = sphi 0, %s23
      %s26 = sphi 0, %s25
      %s40 = sphi 0, %s26
      %s46 = sphi 0, %s48
      %s49 = sphi 0, %s46
      %s50 = sphi 0, %s49
      %s66 = sphi 0, %s50
      %s72 = sphi 0, %s74
      %s75 = sphi 0, %s72
      %s76 = sphi 0, %s75
      %s92 = sphi 0, %s76
    $region4: #{tpu_custom_call.1} parent=1 // loop_header_branch
      %18 = sbr.rel (%p16) target = $region8
    $region5: #{tpu_custom_call.1} parent=1 // loop_body
      %s20 = ssub.s32 %s15, 1
      %s21 = ssub.s32 %s15, 2
      %s22 = sadd.s32 %s15, 1
      %s24 = sadd.s32 %s23, 1
      %p27 = scmp.eq.s32.totalorder %s15, 1
      %p28 = scmp.ne.s32.totalorder %s23, %s25
      %p29 = scmp.eq.s32.totalorder %s15, 0
      %p30 = por %p28, %p29
      %p31 = scmp.ne.s32.totalorder %s23, %s25
      %p32 = scmp.eq.s32.totalorder %s20, 1
      %p33 = por %p31, %p32
      %p34 = scmp.ne.s32.totalorder %s25, %s26
      %p35 = scmp.eq.s32.totalorder %s20, 0
      %p36 = por %p34, %p35
      %p37 = scmp.ne.s32.totalorder %s25, %s26
      %p38 = scmp.eq.s32.totalorder %s21, 1
      %p39 = por %p37, %p38
      %p41 = scmp.ne.s32.totalorder %s26, %s40
      %p42 = scmp.eq.s32.totalorder %s21, 0
      %p43 = por %p41, %p42
      %s44 = ssub.s32 %s15, %s22
      %p45 = scmp.eq.s32.totalorder %s44, 0
      %s47 = sadd.s32 %s46, 1
      %s48 = scalar_select %p45, %s46, %s47
      %p51 = pneg %p45
      %p52 = scmp.eq.s32.totalorder %s15, 1
      %p53 = por %p51, %p52
      %p54 = scmp.ne.s32.totalorder %s46, %s49
      %p55 = scmp.eq.s32.totalorder %s15, 0
      %p56 = por %p54, %p55
      %p57 = scmp.ne.s32.totalorder %s46, %s49
      %p58 = scmp.eq.s32.totalorder %s20, 1
      %p59 = por %p57, %p58
      %p60 = scmp.ne.s32.totalorder %s49, %s50
      %p61 = scmp.eq.s32.totalorder %s20, 0
      %p62 = por %p60, %p61
      %p63 = scmp.ne.s32.totalorder %s49, %s50
      %p64 = scmp.eq.s32.totalorder %s21, 1
      %p65 = por %p63, %p64
      %p67 = scmp.ne.s32.totalorder %s50, %s66
      %p68 = scmp.eq.s32.totalorder %s21, 0
      %p69 = por %p67, %p68
      %s70 = ssub.s32 %s15, %s22
      %p71 = scmp.eq.s32.totalorder %s70, 0
      %s73 = sadd.s32 %s72, 1
      %s74 = scalar_select %p71, %s72, %s73
      %p77 = pneg %p71
      %p78 = scmp.eq.s32.totalorder %s15, 1
      %p79 = por %p77, %p78
      %p80 = scmp.ne.s32.totalorder %s72, %s75
      %p81 = scmp.eq.s32.totalorder %s15, 0
      %p82 = por %p80, %p81
      %p83 = scmp.ne.s32.totalorder %s72, %s75
      %p84 = scmp.eq.s32.totalorder %s20, 1
      %p85 = por %p83, %p84
      %p86 = scmp.ne.s32.totalorder %s75, %s76
      %p87 = scmp.eq.s32.totalorder %s20, 0
      %p88 = por %p86, %p87
      %p89 = scmp.ne.s32.totalorder %s75, %s76
      %p90 = scmp.eq.s32.totalorder %s21, 1
      %p91 = por %p89, %p90
      %p93 = scmp.ne.s32.totalorder %s76, %s92
      %p94 = scmp.eq.s32.totalorder %s21, 0
      %p95 = por %p93, %p94
      %p96 = scmp.le.s32.totalorder 1, %s15
      %p97 = scmp.lt.s32.totalorder %s15, 3
      %p98 = pnand %p96, %p97
      %p99 = pneg %p98
      // Predicated region
      $region9: #{tpu_custom_call.1} parent=5 // pred_check
        _
      $region10: #{tpu_custom_call.1} parent=5 // pred_check_branch
        %101 = sbr.rel (%p98) target = $region12
      $region11: #{tpu_custom_call.1} parent=5 // pred_region
        %s102 = ssub.s32 %s15, 1
        // Predicated region
        $region13: #{tpu_custom_call.1} parent=11 // pred_check
          %p103 = pneg %p36
        $region14: #{tpu_custom_call.1} parent=11 // pred_check_branch
          %105 = sbr.rel (%p103) target = $region16
        $region15: #{tpu_custom_call.1} parent=11 // pred_region
          _
        $region16: #{tpu_custom_call.1} parent=11 // pred_fallthru
          _
      $region12: #{tpu_custom_call.1} parent=5 // pred_fallthru
        _
      %p106 = scmp.lt.s32.totalorder %s15, 2
      // Predicated region
      $region17: #{tpu_custom_call.1} parent=5 // pred_check
        %p107 = pneg %p106
      $region18: #{tpu_custom_call.1} parent=5 // pred_check_branch
        %109 = sbr.rel (%p107) target = $region20
      $region19: #{tpu_custom_call.1} parent=5 // pred_region
        // Predicated region
        $region21: #{tpu_custom_call.1} parent=19 // pred_check
          %p110 = pneg %p56
        $region22: #{tpu_custom_call.1} parent=19 // pred_check_branch
          %112 = sbr.rel (%p110) target = $region24
        $region23: #{tpu_custom_call.1} parent=19 // pred_region
          %s113 = sand.u32 %s46, 1
          %s114 = scalar_lea.sflag [#allocation4], %s113
          %s115 = sand.u32 %s46, 1
          %s116 = smul.addr %s115, 512
          %s117 = scalar_lea.vmem [#allocation3], %s116
          %s118 = smul.u32 8, %s15
          %120 = vsyncadd %s114, 0
          %s121 = smul.addr %s118, 8
          %s122 = smul.addr %s121, 8
          %s123 = scalar_lea.hbm %s1, %s122
          %s124 = sshll.u32 %s123, 4
          %s125 = int_to_ptr.hbm [resolvable:$true] %s124
          %s126 = sshll.u32 %s117, 4
          %s127 = int_to_ptr.vmem [resolvable:$true] %s126
          %132 = dma.hbm_to_vmem [thread:$0]  %s125, 8192, %s127, %s114, 1024, 1024, 64
        $region24: #{tpu_custom_call.1} parent=19 // pred_fallthru
          _
      $region20: #{tpu_custom_call.1} parent=5 // pred_fallthru
        _
      %p133 = scmp.le.s32.totalorder 1, %s15
      %p134 = scmp.lt.s32.totalorder %s15, 3
      %p135 = pnand %p133, %p134
      %p136 = pneg %p135
      // Predicated region
      $region25: #{tpu_custom_call.1} parent=5 // pred_check
        _
      $region26: #{tpu_custom_call.1} parent=5 // pred_check_branch
        %138 = sbr.rel (%p135) target = $region28
      $region27: #{tpu_custom_call.1} parent=5 // pred_region
        %s139 = ssub.s32 %s15, 1
        %s140 = sand.u32 %s49, 1
        %s141 = scalar_lea.sflag [#allocation4], %s140
        %s142 = sand.u32 %s49, 1
        %s143 = smul.addr %s142, 512
        %s144 = scalar_lea.vmem [#allocation3], %s143
        // Predicated region
        $region29: #{tpu_custom_call.1} parent=27 // pred_check
          %p145 = pneg %p62
        $region30: #{tpu_custom_call.1} parent=27 // pred_check_branch
          %147 = sbr.rel (%p145) target = $region32
        $region31: #{tpu_custom_call.1} parent=27 // pred_region
          %149 = dma.done %s141, 8192
        $region32: #{tpu_custom_call.1} parent=27 // pred_fallthru
          _
        %p150 = pneg %p36
        %p151 = pneg %p33
        %s152 = sand.u32 %s49, 1
        %s153 = scalar_lea.sflag [#allocation4], %s152
        %s154 = sand.u32 %s49, 1
        %s155 = smul.addr %s154, 512
        %s156 = scalar_lea.vmem [#allocation3], %s155
        %p157 = pneg %p62
        %p158 = pneg %p59
        %p159 = pneg %p88
        %p160 = pneg %p85
        %s161 = sand.u32 %s75, 1
        %s162 = scalar_lea.sflag [#allocation5], %s161
        %s163 = sand.u32 %s75, 1
        %s164 = smul.addr %s163, 512
        %s165 = scalar_lea.vmem [#allocation6], %s164
        %s166 = smul.u32 8, %s20
        %s167 = smul.u32 8, %s20
        %v168 = vld [vmem:[%s144] sm:$0xff]
        %v169 = vld [vmem:[%s144 + $0x8] sm:$0xff]
        %v170 = vld [vmem:[%s144 + $0x10] sm:$0xff]
        %v171 = vld [vmem:[%s144 + $0x18] sm:$0xff]
        %v172 = vld [vmem:[%s144 + $0x20] sm:$0xff]
        %v173 = vld [vmem:[%s144 + $0x28] sm:$0xff]
        %v174 = vld [vmem:[%s144 + $0x30] sm:$0xff]
        %v175 = vld [vmem:[%s144 + $0x38] sm:$0xff]
        %v176 = vld [vmem:[%s144 + $0x40] sm:$0xff]
        %v177 = vld [vmem:[%s144 + $0x48] sm:$0xff]
        %v178 = vld [vmem:[%s144 + $0x50] sm:$0xff]
        %v179 = vld [vmem:[%s144 + $0x58] sm:$0xff]
        %v180 = vld [vmem:[%s144 + $0x60] sm:$0xff]
        %v181 = vld [vmem:[%s144 + $0x68] sm:$0xff]
        %v182 = vld [vmem:[%s144 + $0x70] sm:$0xff]
        %v183 = vld [vmem:[%s144 + $0x78] sm:$0xff]
        %v184 = vld [vmem:[%s144 + $0x80] sm:$0xff]
        %v185 = vld [vmem:[%s144 + $0x88] sm:$0xff]
        %v186 = vld [vmem:[%s144 + $0x90] sm:$0xff]
        %v187 = vld [vmem:[%s144 + $0x98] sm:$0xff]
        %v188 = vld [vmem:[%s144 + $0xa0] sm:$0xff]
        %v189 = vld [vmem:[%s144 + $0xa8] sm:$0xff]
        %v190 = vld [vmem:[%s144 + $0xb0] sm:$0xff]
        %v191 = vld [vmem:[%s144 + $0xb8] sm:$0xff]
        %v192 = vld [vmem:[%s144 + $0xc0] sm:$0xff]
        %v193 = vld [vmem:[%s144 + $0xc8] sm:$0xff]
        %v194 = vld [vmem:[%s144 + $0xd0] sm:$0xff]
        %v195 = vld [vmem:[%s144 + $0xd8] sm:$0xff]
        %v196 = vld [vmem:[%s144 + $0xe0] sm:$0xff]
        %v197 = vld [vmem:[%s144 + $0xe8] sm:$0xff]
        %v198 = vld [vmem:[%s144 + $0xf0] sm:$0xff]
        %v199 = vld [vmem:[%s144 + $0xf8] sm:$0xff]
        %v200 = vld [vmem:[%s144 + $0x100] sm:$0xff]
        %v201 = vld [vmem:[%s144 + $0x108] sm:$0xff]
        %v202 = vld [vmem:[%s144 + $0x110] sm:$0xff]
        %v203 = vld [vmem:[%s144 + $0x118] sm:$0xff]
        %v204 = vld [vmem:[%s144 + $0x120] sm:$0xff]
        %v205 = vld [vmem:[%s144 + $0x128] sm:$0xff]
        %v206 = vld [vmem:[%s144 + $0x130] sm:$0xff]
        %v207 = vld [vmem:[%s144 + $0x138] sm:$0xff]
        %v208 = vld [vmem:[%s144 + $0x140] sm:$0xff]
        %v209 = vld [vmem:[%s144 + $0x148] sm:$0xff]
        %v210 = vld [vmem:[%s144 + $0x150] sm:$0xff]
        %v211 = vld [vmem:[%s144 + $0x158] sm:$0xff]
        %v212 = vld [vmem:[%s144 + $0x160] sm:$0xff]
        %v213 = vld [vmem:[%s144 + $0x168] sm:$0xff]
        %v214 = vld [vmem:[%s144 + $0x170] sm:$0xff]
        %v215 = vld [vmem:[%s144 + $0x178] sm:$0xff]
        %v216 = vld [vmem:[%s144 + $0x180] sm:$0xff]
        %v217 = vld [vmem:[%s144 + $0x188] sm:$0xff]
        %v218 = vld [vmem:[%s144 + $0x190] sm:$0xff]
        %v219 = vld [vmem:[%s144 + $0x198] sm:$0xff]
        %v220 = vld [vmem:[%s144 + $0x1a0] sm:$0xff]
        %v221 = vld [vmem:[%s144 + $0x1a8] sm:$0xff]
        %v222 = vld [vmem:[%s144 + $0x1b0] sm:$0xff]
        %v223 = vld [vmem:[%s144 + $0x1b8] sm:$0xff]
        %v224 = vld [vmem:[%s144 + $0x1c0] sm:$0xff]
        %v225 = vld [vmem:[%s144 + $0x1c8] sm:$0xff]
        %v226 = vld [vmem:[%s144 + $0x1d0] sm:$0xff]
        %v227 = vld [vmem:[%s144 + $0x1d8] sm:$0xff]
        %v228 = vld [vmem:[%s144 + $0x1e0] sm:$0xff]
        %v229 = vld [vmem:[%s144 + $0x1e8] sm:$0xff]
        %v230 = vld [vmem:[%s144 + $0x1f0] sm:$0xff]
        %v231 = vld [vmem:[%s144 + $0x1f8] sm:$0xff]
        %s232 = sld [smem:[#allocation2]]
        %v233 = vstv %s232
        %v234 = vadd.f32 %v168, %v233
        %v235 = vadd.f32 %v169, %v233
        %v236 = vadd.f32 %v170, %v233
        %v237 = vadd.f32 %v171, %v233
        %v238 = vadd.f32 %v172, %v233
        %v239 = vadd.f32 %v173, %v233
        %v240 = vadd.f32 %v174, %v233
        %v241 = vadd.f32 %v175, %v233
        %v242 = vadd.f32 %v176, %v233
        %v243 = vadd.f32 %v177, %v233
        %v244 = vadd.f32 %v178, %v233
        %v245 = vadd.f32 %v179, %v233
        %v246 = vadd.f32 %v180, %v233
        %v247 = vadd.f32 %v181, %v233
        %v248 = vadd.f32 %v182, %v233
        %v249 = vadd.f32 %v183, %v233
        %v250 = vadd.f32 %v184, %v233
        %v251 = vadd.f32 %v185, %v233
        %v252 = vadd.f32 %v186, %v233
        %v253 = vadd.f32 %v187, %v233
        %v254 = vadd.f32 %v188, %v233
        %v255 = vadd.f32 %v189, %v233
        %v256 = vadd.f32 %v190, %v233
        %v257 = vadd.f32 %v191, %v233
        %v258 = vadd.f32 %v192, %v233
        %v259 = vadd.f32 %v193, %v233
        %v260 = vadd.f32 %v194, %v233
        %v261 = vadd.f32 %v195, %v233
        %v262 = vadd.f32 %v196, %v233
        %v263 = vadd.f32 %v197, %v233
        %v264 = vadd.f32 %v198, %v233
        %v265 = vadd.f32 %v199, %v233
        %v266 = vadd.f32 %v200, %v233
        %v267 = vadd.f32 %v201, %v233
        %v268 = vadd.f32 %v202, %v233
        %v269 = vadd.f32 %v203, %v233
        %v270 = vadd.f32 %v204, %v233
        %v271 = vadd.f32 %v205, %v233
        %v272 = vadd.f32 %v206, %v233
        %v273 = vadd.f32 %v207, %v233
        %v274 = vadd.f32 %v208, %v233
        %v275 = vadd.f32 %v209, %v233
        %v276 = vadd.f32 %v210, %v233
        %v277 = vadd.f32 %v211, %v233
        %v278 = vadd.f32 %v212, %v233
        %v279 = vadd.f32 %v213, %v233
        %v280 = vadd.f32 %v214, %v233
        %v281 = vadd.f32 %v215, %v233
        %v282 = vadd.f32 %v216, %v233
        %v283 = vadd.f32 %v217, %v233
        %v284 = vadd.f32 %v218, %v233
        %v285 = vadd.f32 %v219, %v233
        %v286 = vadd.f32 %v220, %v233
        %v287 = vadd.f32 %v221, %v233
        %v288 = vadd.f32 %v222, %v233
        %v289 = vadd.f32 %v223, %v233
        %v290 = vadd.f32 %v224, %v233
        %v291 = vadd.f32 %v225, %v233
        %v292 = vadd.f32 %v226, %v233
        %v293 = vadd.f32 %v227, %v233
        %v294 = vadd.f32 %v228, %v233
        %v295 = vadd.f32 %v229, %v233
        %v296 = vadd.f32 %v230, %v233
        %v297 = vadd.f32 %v231, %v233
        %298 = vst [vmem:[%s165] sm:$0xff] %v234
        %299 = vst [vmem:[%s165 + $0x8] sm:$0xff] %v235
        %300 = vst [vmem:[%s165 + $0x10] sm:$0xff] %v236
        %301 = vst [vmem:[%s165 + $0x18] sm:$0xff] %v237
        %302 = vst [vmem:[%s165 + $0x20] sm:$0xff] %v238
        %303 = vst [vmem:[%s165 + $0x28] sm:$0xff] %v239
        %304 = vst [vmem:[%s165 + $0x30] sm:$0xff] %v240
        %305 = vst [vmem:[%s165 + $0x38] sm:$0xff] %v241
        %306 = vst [vmem:[%s165 + $0x40] sm:$0xff] %v242
        %307 = vst [vmem:[%s165 + $0x48] sm:$0xff] %v243
        %308 = vst [vmem:[%s165 + $0x50] sm:$0xff] %v244
        %309 = vst [vmem:[%s165 + $0x58] sm:$0xff] %v245
        %310 = vst [vmem:[%s165 + $0x60] sm:$0xff] %v246
        %311 = vst [vmem:[%s165 + $0x68] sm:$0xff] %v247
        %312 = vst [vmem:[%s165 + $0x70] sm:$0xff] %v248
        %313 = vst [vmem:[%s165 + $0x78] sm:$0xff] %v249
        %314 = vst [vmem:[%s165 + $0x80] sm:$0xff] %v250
        %315 = vst [vmem:[%s165 + $0x88] sm:$0xff] %v251
        %316 = vst [vmem:[%s165 + $0x90] sm:$0xff] %v252
        %317 = vst [vmem:[%s165 + $0x98] sm:$0xff] %v253
        %318 = vst [vmem:[%s165 + $0xa0] sm:$0xff] %v254
        %319 = vst [vmem:[%s165 + $0xa8] sm:$0xff] %v255
        %320 = vst [vmem:[%s165 + $0xb0] sm:$0xff] %v256
        %321 = vst [vmem:[%s165 + $0xb8] sm:$0xff] %v257
        %322 = vst [vmem:[%s165 + $0xc0] sm:$0xff] %v258
        %323 = vst [vmem:[%s165 + $0xc8] sm:$0xff] %v259
        %324 = vst [vmem:[%s165 + $0xd0] sm:$0xff] %v260
        %325 = vst [vmem:[%s165 + $0xd8] sm:$0xff] %v261
        %326 = vst [vmem:[%s165 + $0xe0] sm:$0xff] %v262
        %327 = vst [vmem:[%s165 + $0xe8] sm:$0xff] %v263
        %328 = vst [vmem:[%s165 + $0xf0] sm:$0xff] %v264
        %329 = vst [vmem:[%s165 + $0xf8] sm:$0xff] %v265
        %330 = vst [vmem:[%s165 + $0x100] sm:$0xff] %v266
        %331 = vst [vmem:[%s165 + $0x108] sm:$0xff] %v267
        %332 = vst [vmem:[%s165 + $0x110] sm:$0xff] %v268
        %333 = vst [vmem:[%s165 + $0x118] sm:$0xff] %v269
        %334 = vst [vmem:[%s165 + $0x120] sm:$0xff] %v270
        %335 = vst [vmem:[%s165 + $0x128] sm:$0xff] %v271
        %336 = vst [vmem:[%s165 + $0x130] sm:$0xff] %v272
        %337 = vst [vmem:[%s165 + $0x138] sm:$0xff] %v273
        %338 = vst [vmem:[%s165 + $0x140] sm:$0xff] %v274
        %339 = vst [vmem:[%s165 + $0x148] sm:$0xff] %v275
        %340 = vst [vmem:[%s165 + $0x150] sm:$0xff] %v276
        %341 = vst [vmem:[%s165 + $0x158] sm:$0xff] %v277
        %342 = vst [vmem:[%s165 + $0x160] sm:$0xff] %v278
        %343 = vst [vmem:[%s165 + $0x168] sm:$0xff] %v279
        %344 = vst [vmem:[%s165 + $0x170] sm:$0xff] %v280
        %345 = vst [vmem:[%s165 + $0x178] sm:$0xff] %v281
        %346 = vst [vmem:[%s165 + $0x180] sm:$0xff] %v282
        %347 = vst [vmem:[%s165 + $0x188] sm:$0xff] %v283
        %348 = vst [vmem:[%s165 + $0x190] sm:$0xff] %v284
        %349 = vst [vmem:[%s165 + $0x198] sm:$0xff] %v285
        %350 = vst [vmem:[%s165 + $0x1a0] sm:$0xff] %v286
        %351 = vst [vmem:[%s165 + $0x1a8] sm:$0xff] %v287
        %352 = vst [vmem:[%s165 + $0x1b0] sm:$0xff] %v288
        %353 = vst [vmem:[%s165 + $0x1b8] sm:$0xff] %v289
        %354 = vst [vmem:[%s165 + $0x1c0] sm:$0xff] %v290
        %355 = vst [vmem:[%s165 + $0x1c8] sm:$0xff] %v291
        %356 = vst [vmem:[%s165 + $0x1d0] sm:$0xff] %v292
        %357 = vst [vmem:[%s165 + $0x1d8] sm:$0xff] %v293
        %358 = vst [vmem:[%s165 + $0x1e0] sm:$0xff] %v294
        %359 = vst [vmem:[%s165 + $0x1e8] sm:$0xff] %v295
        %360 = vst [vmem:[%s165 + $0x1f0] sm:$0xff] %v296
        %361 = vst [vmem:[%s165 + $0x1f8] sm:$0xff] %v297
        %s362 = sand.u32 %s75, 1
        %s363 = scalar_lea.sflag [#allocation5], %s362
        %s364 = sand.u32 %s75, 1
        %s365 = smul.addr %s364, 512
        %s366 = scalar_lea.vmem [#allocation6], %s365
        // Predicated region
        $region33: #{tpu_custom_call.1} parent=27 // pred_check
          %p367 = pneg %p85
        $region34: #{tpu_custom_call.1} parent=27 // pred_check_branch
          %369 = sbr.rel (%p367) target = $region36
        $region35: #{tpu_custom_call.1} parent=27 // pred_region
          %s370 = smul.u32 8, %s20
          %372 = vsyncadd %s363, 0
          %s373 = smul.addr %s370, 8
          %s374 = smul.addr %s373, 8
          %s375 = scalar_lea.hbm %s2, %s374
          %s376 = sshll.u32 %s366, 4
          %s377 = int_to_ptr.vmem [resolvable:$true] %s376
          %s378 = sshll.u32 %s375, 4
          %s379 = int_to_ptr.hbm [resolvable:$true] %s378
          %384 = dma.vmem_to_hbm [thread:$0]  %s377, 8192, %s379, %s363, 1024, 1024, 64
        $region36: #{tpu_custom_call.1} parent=27 // pred_fallthru
          _
      $region28: #{tpu_custom_call.1} parent=5 // pred_fallthru
        _
      %p385 = scmp.le.s32.totalorder 2, %s15
      // Predicated region
      $region37: #{tpu_custom_call.1} parent=5 // pred_check
        %p386 = pneg %p385
      $region38: #{tpu_custom_call.1} parent=5 // pred_check_branch
        %388 = sbr.rel (%p386) target = $region40
      $region39: #{tpu_custom_call.1} parent=5 // pred_region
        %s389 = ssub.s32 %s15, 2
        // Predicated region
        $region41: #{tpu_custom_call.1} parent=39 // pred_check
          %p390 = pneg %p91
        $region42: #{tpu_custom_call.1} parent=39 // pred_check_branch
          %392 = sbr.rel (%p390) target = $region44
        $region43: #{tpu_custom_call.1} parent=39 // pred_region
          %s393 = sand.u32 %s76, 1
          %s394 = scalar_lea.sflag [#allocation5], %s393
          %s395 = sand.u32 %s76, 1
          %s396 = smul.addr %s395, 512
          %s397 = scalar_lea.vmem [#allocation6], %s396
          %399 = dma.done %s394, 8192
        $region44: #{tpu_custom_call.1} parent=39 // pred_fallthru
          _
      $region40: #{tpu_custom_call.1} parent=5 // pred_fallthru
        _
    $region6: #{tpu_custom_call.1} parent=1 // loop_footer
      %s19 = sadd.s32 1, %s15
    $region7: #{tpu_custom_call.1} parent=1 // loop_footer_branch
      %14 = sbr.rel target = $region3
    $region8: #{tpu_custom_call.1} parent=1 // loop_exit
      _
    %400 = vsyncpa [#allocation4], 1
    %s401 = scalar_lea.sflag [#allocation4], 1
    %402 = vsyncpa %s401, 1
    %403 = vsyncpa [#allocation5], 1
    %s404 = scalar_lea.sflag [#allocation5], 1
    %405 = vsyncpa %s404, 1

</llo_original>
